<compile_context>
chip_gen: v5e
topology: v5e:2x2
jax: 0.10.0
libtpu: 0.0.40
codegen_flags: <defaults>
</compile_context>

<pallas_src>
import functools
import math

import numpy as np
import jax
import jax.numpy as jnp
from jax.experimental import pallas as pl
from jax.experimental.pallas import tpu as pltpu

_LANES = 128
_MAX_TILE_ROWS = 2048     # (2048, 128) f32 tile = 1 MiB/buffer; ~4 MiB double-buffered
_SMALL_1D_MAX = 4096      # biases up to this size take the (1, n) single-block path


def _softplus_eps_kernel(b_ref, o_ref, *, eps):
    # Numerically-stable softplus: max(x,0) + log1p(exp(-|x|)).
    # exp / log1p run on the EUP; max/abs/add on the VPU.
    # Compute in f32 regardless of the parameter dtype; cast at the store.
    b = b_ref[...].astype(jnp.float32)
    y = jnp.maximum(b, 0.0) + jnp.log1p(jnp.exp(-jnp.abs(b))) + jnp.float32(eps)
    o_ref[...] = y.astype(o_ref.dtype)


def _cost(n, dtype):
    itemsize = np.dtype(dtype).itemsize
    return pl.CostEstimate(flops=4 * n, transcendentals=2 * n,
                           bytes_accessed=2 * n * itemsize)


def _softplus_slab(slab, eps):
    """Elementwise softplus(slab) + eps for a 2-D slab (shape preserving)."""
    rows, lanes = slab.shape
    n = rows * lanes
    dtype = slab.dtype
    kernel = functools.partial(_softplus_eps_kernel, eps=eps)

    if rows <= _MAX_TILE_ROWS:
        # Single full-array block, no grid (full-array blocks are exempt from the
        # (8,128) divisibility rule) -> no grid-loop scaffolding at all.
        return pl.pallas_call(
            kernel,
            out_shape=jax.ShapeDtypeStruct((rows, lanes), dtype),
            cost_estimate=_cost(n, dtype),
        )(slab)

    # Large parameter: 1-D parallel grid of (2048, 128) tiles.  cdiv grid; the
    # partial last block (if any) is masked by Pallas, so no wrapper-side pad.
    grid = pl.cdiv(rows, _MAX_TILE_ROWS)
    return pl.pallas_call(
        kernel,
        out_shape=jax.ShapeDtypeStruct((rows, lanes), dtype),
        grid=(grid,),
        in_specs=[pl.BlockSpec((_MAX_TILE_ROWS, lanes), lambda i: (i, 0))],
        out_specs=pl.BlockSpec((_MAX_TILE_ROWS, lanes), lambda i: (i, 0)),
        compiler_params=pltpu.CompilerParams(
            dimension_semantics=("parallel",)),   # shards across TCs on v7x
        cost_estimate=_cost(n, dtype),
    )(slab)


def variance_encoder_forward(b, eps=1e-5):
    """Return softplus(b) + eps with the same shape/dtype as the parameter b.

    Mirrors VarianceEncoder.forward(x): the activation x is ignored; the output
    shape equals b.shape (e.g. (1, C, 1, 1), (1, 1, C), or the full shape when
    channelwise=False).
    """
    orig_shape = b.shape
    n = b.size

    if n % _LANES == 0:
        # Lane-dense slab view: pure metadata reshape, no pad, no output slice.
        out = _softplus_slab(b.reshape(n // _LANES, _LANES), eps)
        return out.reshape(orig_shape)

    if n <= _SMALL_1D_MAX:
        # Typical channelwise bias: one tiny (1, n) block, no grid, no pad/slice.
        out = _softplus_slab(b.reshape(1, n), eps)
        return out.reshape(orig_shape)

    # Rare: large parameter whose size is not a multiple of 128.  Pad by < 128
    # elements to the next lane multiple and slice back afterwards.
    # TODO(synk): replace this pad/slice round-trip with an in-kernel masked
    # store of the ragged tail if such shapes ever matter.
    rows = pl.cdiv(n, _LANES)
    padded = rows * _LANES
    slab = jnp.pad(b.reshape(-1), (0, padded - n)).reshape(rows, _LANES)
    out = _softplus_slab(slab, eps)
    return out.reshape(-1)[:n].reshape(orig_shape)


def make_variance_encoder_params(shape, init=0.1, channelwise=True, eps=1e-5,
                                 dtype=jnp.float32):
    """Deterministic parameter init mirroring the PyTorch __init__."""
    if init <= eps:
        raise ValueError("init must be > eps (softplus inverse of a non-positive "
                         "value is undefined)")
    init_val = math.log(math.exp(init - eps) - 1.0)     # softplus^{-1}(init - eps)
    if channelwise:
        if len(shape) == 4:
            b_shape = (1, shape[1], 1, 1)
        elif len(shape) == 3:
            b_shape = (1, 1, shape[2])
        else:
            raise ValueError("channelwise VarianceEncoder expects a 3-D or 4-D shape")
    else:
        b_shape = tuple(shape)
    return jnp.full(b_shape, init_val, dtype=dtype)


if __name__ == "__main__":
    key = jax.random.PRNGKey(0)
    eps = 1e-5

    # Small NCHW input consistent with the module; forward ignores x by design.
    x = jax.random.normal(key, (2, 4, 16, 16), dtype=jnp.float32)

    # 4-D channelwise: b of shape (1, 4, 1, 1) -> tiny (1, n) single-block path.
    b4 = make_variance_encoder_params((2, 4, 16, 16), init=0.1, channelwise=True, eps=eps)
    out4 = jax.block_until_ready(variance_encoder_forward(b4, eps=eps))
    assert out4.shape == b4.shape == (1, 4, 1, 1)
    assert jnp.allclose(out4, jax.nn.softplus(b4) + eps, atol=1e-6, rtol=1e-6)
    assert jnp.allclose(out4, 0.1, atol=1e-5)            # recovers init

    # 3-D channelwise: b of shape (1, 1, 32).
    b3 = make_variance_encoder_params((2, 8, 32), init=0.2, channelwise=True, eps=eps)
    out3 = jax.block_until_ready(variance_encoder_forward(b3, eps=eps))
    assert out3.shape == (1, 1, 32)
    assert jnp.allclose(out3, jax.nn.softplus(b3) + eps, atol=1e-6, rtol=1e-6)
    assert jnp.allclose(out3, 0.2, atol=1e-5)

    # channelwise=False: b has the full shape (2, 4, 16, 16) = 2048 elements ->
    # lane-dense (16, 128) slab, single full-array block, no pad/slice.
    bf = make_variance_encoder_params((2, 4, 16, 16), init=0.3, channelwise=False, eps=eps)
    bf = bf + 0.01 * jax.random.normal(jax.random.PRNGKey(1), bf.shape, dtype=bf.dtype)
    outf = jax.block_until_ready(variance_encoder_forward(bf, eps=eps))
    assert outf.shape == (2, 4, 16, 16)
    assert jnp.allclose(outf, jax.nn.softplus(bf) + eps, atol=1e-6, rtol=1e-6)

    print("KERNEL_OK")
</pallas_src>

<mosaic_0001>
module attributes {stable_mosaic.version = 11 : i64} {
  func.func @_softplus_eps_kernel(%arg0: memref<1x4xf32, #tpu.memory_space<vmem>>, %arg1: memref<1x4xf32, #tpu.memory_space<vmem>>) attributes {dimension_semantics = [], scalar_prefetch = 0 : i64, scratch_operands = 0 : i64, tpu.core_type = #tpu.core_type<tc>} {
    %c0 = arith.constant 0 : index
    %c0_0 = arith.constant 0 : index
    %0 = vector.load %arg0[%c0, %c0_0] : memref<1x4xf32, #tpu.memory_space<vmem>>, vector<1x4xf32>
    %cst = arith.constant 0.000000e+00 : f32
    %1 = vector.broadcast %cst : f32 to vector<1x4xf32>
    %2 = arith.maximumf %0, %1 : vector<1x4xf32>
    %3 = math.absf %0 : vector<1x4xf32>
    %cst_1 = arith.constant 0.000000e+00 : f32
    %4 = vector.broadcast %cst_1 : f32 to vector<1x4xf32>
    %5 = arith.subf %4, %3 : vector<1x4xf32>
    %6 = math.exp %5 : vector<1x4xf32>
    %7 = math.log1p %6 : vector<1x4xf32>
    %8 = arith.addf %2, %7 : vector<1x4xf32>
    %cst_2 = arith.constant 9.99999974E-6 : f32
    %9 = vector.broadcast %cst_2 : f32 to vector<1x4xf32>
    %10 = arith.addf %8, %9 : vector<1x4xf32>
    %c0_3 = arith.constant 0 : index
    %c0_4 = arith.constant 0 : index
    %11 = vector.load %arg1[%c0_3, %c0_4] : memref<1x4xf32, #tpu.memory_space<vmem>>, vector<1x4xf32>
    tpu.vector_store %arg1[%c0_3, %c0_4], %10 {strides = array<i32>} : memref<1x4xf32, #tpu.memory_space<vmem>>, vector<1x4xf32>,
    return
  }
}

</mosaic_0001>

<llo_original>
// kernel: tpu_custom_call.1
$region0: #{tpu_custom_call.1}
  #allocation0 [shape = 'u32[]', space=smem, size = 0x4, offset = 0x4, fixed_abs, tag = 'smem constant byte address 0x4 - core index']
  #allocation1 [shape = 'u32[72,128]{1,0:T(1,128)}', space=vmem, size = 0x9000, scoped, tag = 'internal scratch']
  %s0 = inlined_call_operand.hbm [shape: f32[1,4], index: 0, kind: input, shape index: {}]
  %s1 = inlined_call_operand.hbm [shape: f32[1,4], index: 1, kind: output, shape index: {}]
  %s2 = sld [smem:[#allocation0]]
  $region18: #{tpu_custom_call.1} parent=0
    _
  %s4 = ssub.s32 1, %s2
  %s5 = scalar_select 0, %s4, %s2
  $region1: #{tpu_custom_call.1} parent=0
    #allocation2 [shape = 'u8[512]{0}', space=vmem, size = 0x400, scoped, tag = 'input window, operand 0, single buffered']
    #allocation3 [shape = 's32[1]{0}', space=sflag, size = 0x4, scoped, tag = 'scoped memory for tpu_custom_call.1']
    #allocation4 [shape = 's32[1]{0}', space=sflag, size = 0x4, scoped, tag = 'scoped memory for tpu_custom_call.1']
    #allocation5 [shape = 'u8[512]{0}', space=vmem, size = 0x400, scoped, tag = 'output window, operand 0, single buffered']
    %6 = vsyncpa [#allocation3], 0
    %7 = vsyncpa [#allocation4], 0
    // Predicated region
    $region2: #{tpu_custom_call.1} parent=1 // pred_check
      _
    $region3: #{tpu_custom_call.1} parent=1 // pred_check_branch
      %9 = sbr.rel (0) target = $region5
    $region4: #{tpu_custom_call.1} parent=1 // pred_region
      %11 = vsyncadd [#allocation3], 0
      %s13 = sshll.u32 %s0, 4
      %s14 = int_to_ptr.hbm [resolvable:$true] %s13
      %s15 = sshll.u32 [#allocation2], 4
      %s16 = int_to_ptr.vmem [resolvable:$true] %s15
      %18 = dma.hbm_to_vmem [thread:$0]  %s14, 16, %s16, [#allocation3]
    $region5: #{tpu_custom_call.1} parent=1 // pred_fallthru
      _
    // Predicated region
    $region6: #{tpu_custom_call.1} parent=1 // pred_check
      _
    $region7: #{tpu_custom_call.1} parent=1 // pred_check_branch
      %20 = sbr.rel (0) target = $region9
    $region8: #{tpu_custom_call.1} parent=1 // pred_region
      %22 = dma.done [#allocation3], 16
    $region9: #{tpu_custom_call.1} parent=1 // pred_fallthru
      _
    %v23 = vld [vmem:[#allocation2] sm:$0x1]
    %v24 = vmax.f32 %v23, 0.0
    %v25 = vand.u32 2147483647, %v23
    %v26 = vsub.f32 0.0, %v25
    %v27 = vmul.f32 %v26, 1.442695
    %v28 = vpow.pop %v27
    %v29 = vadd.f32 %v28, 1.0
    %v30 = vlog2.pop %v29
    %v31 = vmul.f32 %v30, 0.6931472
    %v32 = vmul.f32 -0.5, %v28
    %v33 = vadd.f32 %v32, 1.0
    %v34 = vmul.f32 %v33, %v28
    %v35 = vand.u32 2147483647, %v28
    %vm36 = vcmp.lt.f32.partialorder %v35, 0.0004427343
    %v37 = vsel %vm36, %v34, %v31
    %v38 = vadd.f32 %v24, %v37
    %v39 = vadd.f32 %v38, 1e-05
    %vm40 = vcmask 24576
    %41 = vst.msk [vmem:[#allocation5] sm:$0x1] %vm40, %v39
    // Predicated region
    $region10: #{tpu_custom_call.1} parent=1 // pred_check
      _
    $region11: #{tpu_custom_call.1} parent=1 // pred_check_branch
      %43 = sbr.rel (0) target = $region13
    $region12: #{tpu_custom_call.1} parent=1 // pred_region
      %45 = vsyncadd [#allocation4], 0
      %s47 = sshll.u32 [#allocation5], 4
      %s48 = int_to_ptr.vmem [resolvable:$true] %s47
      %s49 = sshll.u32 %s1, 4
      %s50 = int_to_ptr.hbm [resolvable:$true] %s49
      %52 = dma.vmem_to_hbm [thread:$0]  %s48, 16, %s50, [#allocation4]
    $region13: #{tpu_custom_call.1} parent=1 // pred_fallthru
      _
    // Predicated region
    $region14: #{tpu_custom_call.1} parent=1 // pred_check
      _
    $region15: #{tpu_custom_call.1} parent=1 // pred_check_branch
      %54 = sbr.rel (0) target = $region17
    $region16: #{tpu_custom_call.1} parent=1 // pred_region
      %56 = dma.done [#allocation4], 16
    $region17: #{tpu_custom_call.1} parent=1 // pred_fallthru
      _
    %57 = vsyncpa [#allocation3], 1
    %58 = vsyncpa [#allocation4], 1

</llo_original>
